<compile_context>
chip_gen: v7x
topology: tpu7x:2x2x1
jax: 0.10.0
libtpu: 0.0.40
codegen_flags: <defaults>
</compile_context>

<pallas_src>
import functools

import jax
import jax.numpy as jnp
from jax import lax
from jax.experimental import pallas as pl
from jax.experimental.pallas import tpu as pltpu


# ----------------------------------------------------------------------------
# Pass 1: per-channel batch statistics -> folded BN scale/shift.
# ----------------------------------------------------------------------------
def _stats_kernel(x_ref, params_ref, stats_ref, acc_ref, *, total_rows, eps):
    b = pl.program_id(0)
    j = pl.program_id(1)
    nb = pl.num_programs(0)
    nj = pl.num_programs(1)

    @pl.when((b == 0) & (j == 0))
    def _init():
        acc_ref[...] = jnp.zeros_like(acc_ref)

    xs = x_ref[...].astype(jnp.float32)               # (TS, C)
    s = jnp.sum(xs, axis=0, keepdims=True)            # (1, C)
    sq = jnp.sum(xs * xs, axis=0, keepdims=True)      # (1, C)
    acc_ref[...] += jnp.concatenate([s, sq], axis=0)  # rows: sum, sumsq

    @pl.when((b == nb - 1) & (j == nj - 1))
    def _finalize():
        c = stats_ref.shape[1]
        inv_n = jnp.float32(1.0 / total_rows)
        mean = acc_ref[0:1, :] * inv_n
        var = acc_ref[1:2, :] * inv_n - mean * mean    # biased var (PyTorch BN)
        gamma = params_ref[0:1, :]
        beta = params_ref[1:2, :]
        scale = gamma * lax.rsqrt(var + eps)
        shift = beta - mean * scale
        stats_ref[...] = jnp.concatenate(
            [scale, shift, jnp.zeros((6, c), jnp.float32)], axis=0)


# ----------------------------------------------------------------------------
# Pass 2: BN apply + depthwise conv3 (along N) + output Linear, per row tile.
# ----------------------------------------------------------------------------
def _apply_kernel(x_ref, prev_ref, next_ref, stats_ref, params_ref, wt_ref,
                  o_ref):
    j = pl.program_id(1)
    nj = pl.num_programs(1)
    tn, c = x_ref.shape

    scale = stats_ref[0:1, :]
    shift = stats_ref[1:2, :]
    w_m1 = params_ref[2:3, :]     # conv tap for x[n-1]
    w_c = params_ref[3:4, :]      # conv tap for x[n]
    w_p1 = params_ref[4:5, :]     # conv tap for x[n+1]
    b_conv = params_ref[5:6, :]
    b_out = params_ref[6:7, :]

    # BatchNorm as a folded per-channel affine.
    xb = x_ref[...].astype(jnp.float32) * scale + shift            # (TN, C)

    # Halo rows from neighboring tiles (BN applied; zeroed at sequence ends
    # because Conv1d zero-pads the *post-BN* tensor).
    prev_valid = (j > 0).astype(jnp.float32)
    next_valid = (j < nj - 1).astype(jnp.float32)
    prev_bn = (prev_ref[...].astype(jnp.float32) * scale + shift) * prev_valid
    next_bn = (next_ref[...].astype(jnp.float32) * scale + shift) * next_valid

    # Shifted copies via XLU roll + row-mask (no concatenate copies; roll and
    # the select run on XLU/VPU slots that the MXU matmul below doesn't use).
    row = lax.broadcasted_iota(jnp.int32, (tn, c), 0)
    x_prev = jnp.where(row == 0, prev_bn, pltpu.roll(xb, shift=1, axis=0))
    x_next = jnp.where(row == tn - 1, next_bn,
                       pltpu.roll(xb, shift=tn - 1, axis=0))

    # Depthwise 3-tap conv along N (lane-wise multiply-adds).
    y = xb * w_c + b_conv
    y = y + x_prev * w_m1
    y = y + x_next * w_p1

    # Output Linear: one 2-D lane-dense MXU matmul per tile.
    out = jnp.dot(y, wt_ref[...], preferred_element_type=jnp.float32) + b_out
    o_ref[...] = out.astype(o_ref.dtype)


def _pick_tile(n, cap):
    """Largest multiple of 8 that divides n and is <= cap; fallback: n."""
    for t in range(min(n, cap), 7, -1):
        if t % 8 == 0 and n % t == 0:
            return t
    return n


def local_representation(x, gamma, beta, w_conv, b_conv, w_out, b_out, *,
                         eps=1e-5, max_tile_rows=512, max_stats_tile_rows=1024):
    """x: (B, N, C). Parameters follow PyTorch shapes:
       gamma/beta (C,), w_conv (C,1,3), b_conv (C,), w_out (C,C), b_out (C,)."""
    B, N, C = x.shape
    f32 = jnp.float32
    itemsize = jnp.dtype(x.dtype).itemsize

    # Pack per-channel params into one (8, C) block:
    #   0: gamma, 1: beta, 2..4: conv taps (n-1, n, n+1), 5: conv bias,
    #   6: linear bias, 7: unused.
    params = jnp.concatenate([
        gamma.reshape(1, C).astype(f32),
        beta.reshape(1, C).astype(f32),
        jnp.transpose(w_conv.reshape(C, 3)).astype(f32),
        b_conv.reshape(1, C).astype(f32),
        b_out.reshape(1, C).astype(f32),
        jnp.zeros((1, C), f32),
    ], axis=0)                                        # (8, C)

    wt = jnp.transpose(w_out).astype(f32)             # (C_in, C_out)

    # Tile sizes: the apply pass holds x, out, and the (C, C) weight in VMEM
    # plus halos, so cap at 512 rows; the stats pass only streams x, so a
    # larger tile reduces per-step overhead on the mem-bound sweep.
    TN = _pick_tile(N, max_tile_rows)
    n_tiles = N // TN
    TS = _pick_tile(N, max_stats_tile_rows)
    n_stats_tiles = N // TS

    # Halo rows (raw x; BN is applied in-kernel). prev_edges[b, j] = x[b, j*TN-1]
    # (zeros for j == 0); next_edges[b, j] = x[b, (j+1)*TN] (zeros for last j).
    zeros_edge = jnp.zeros((B, 1, C), x.dtype)
    if n_tiles > 1:
        prev_rows = x[:, TN - 1:N - 1:TN, :]
        next_rows = x[:, TN::TN, :]
        prev_edges = jnp.concatenate([zeros_edge, prev_rows], axis=1)
        next_edges = jnp.concatenate([next_rows, zeros_edge], axis=1)
    else:
        prev_edges = zeros_edge
        next_edges = zeros_edge
    prev_edges = prev_edges.reshape(B, n_tiles, 1, C)
    next_edges = next_edges.reshape(B, n_tiles, 1, C)

    # ---- Pass 1: batch statistics (reduction grid, accumulator scratch). ----
    stats = pl.pallas_call(
        functools.partial(_stats_kernel, total_rows=B * N, eps=eps),
        out_shape=jax.ShapeDtypeStruct((8, C), f32),
        grid=(B, n_stats_tiles),
        in_specs=[
            pl.BlockSpec((None, TS, C), lambda b, j: (b, j, 0)),
            pl.BlockSpec((8, C), lambda b, j: (0, 0)),
        ],
        out_specs=pl.BlockSpec((8, C), lambda b, j: (0, 0)),
        scratch_shapes=[pltpu.VMEM((2, C), f32)],
        compiler_params=pltpu.CompilerParams(
            dimension_semantics=("arbitrary", "arbitrary")),
        cost_estimate=pl.CostEstimate(
            flops=int(3 * B * N * C), transcendentals=0,
            bytes_accessed=int(B * N * C * itemsize + 16 * C * 4)),
    )(x, params)

    # ---- Pass 2: apply BN + conv + Linear per row tile (parallel grid). ----
    out = pl.pallas_call(
        _apply_kernel,
        out_shape=jax.ShapeDtypeStruct((B, N, C), x.dtype),
        grid=(B, n_tiles),
        in_specs=[
            pl.BlockSpec((None, TN, C), lambda b, j: (b, j, 0)),
            pl.BlockSpec((None, None, 1, C), lambda b, j: (b, j, 0, 0)),
            pl.BlockSpec((None, None, 1, C), lambda b, j: (b, j, 0, 0)),
            pl.BlockSpec((8, C), lambda b, j: (0, 0)),
            pl.BlockSpec((8, C), lambda b, j: (0, 0)),
            pl.BlockSpec((C, C), lambda b, j: (0, 0)),
        ],
        out_specs=pl.BlockSpec((None, TN, C), lambda b, j: (b, j, 0)),
        compiler_params=pltpu.CompilerParams(
            dimension_semantics=("parallel", "parallel")),
        cost_estimate=pl.CostEstimate(
            flops=int(2 * B * N * C * C + 10 * B * N * C), transcendentals=0,
            bytes_accessed=int(2 * B * N * C * itemsize + C * C * 4)),
    )(x, prev_edges, next_edges, stats, params, wt)
    return out


# ----------------------------------------------------------------------------
# Pure-JAX reference (matches the PyTorch module, training-mode BN).
# ----------------------------------------------------------------------------
def _reference(x, gamma, beta, w_conv, b_conv, w_out, b_out, eps=1e-5):
    mean = jnp.mean(x, axis=(0, 1))
    var = jnp.mean(jnp.square(x - mean), axis=(0, 1))
    x_bn = (x - mean) * lax.rsqrt(var + eps) * gamma + beta
    taps = w_conv.reshape(-1, 3)                      # (C, 3)
    xp = jnp.pad(x_bn, ((0, 0), (1, 1), (0, 0)))
    x_conv = (xp[:, :-2, :] * taps[:, 0] + xp[:, 1:-1, :] * taps[:, 1]
              + xp[:, 2:, :] * taps[:, 2] + b_conv)
    return x_conv @ w_out.T + b_out


if __name__ == "__main__":
    d_model = 128
    B, N, C = 2, 16, d_model

    key = jax.random.PRNGKey(0)
    kx, kwc, kbc, kwo, kbo, kx2 = jax.random.split(key, 6)

    x = jax.random.normal(kx, (B, N, C), dtype=jnp.float32)

    # BatchNorm1d default init: gamma = 1, beta = 0.
    gamma = jnp.ones((C,), jnp.float32)
    beta = jnp.zeros((C,), jnp.float32)
    # Conv1d(d_model, d_model, 3, groups=d_model): weight (C, 1, 3), bias (C,).
    w_conv = 0.1 * jax.random.normal(kwc, (C, 1, 3), dtype=jnp.float32)
    b_conv = 0.1 * jax.random.normal(kbc, (C,), dtype=jnp.float32)
    # Linear(d_model, d_model): weight (C_out, C_in), bias (C_out,).
    w_out = 0.05 * jax.random.normal(kwo, (C, C), dtype=jnp.float32)
    b_out = 0.05 * jax.random.normal(kbo, (C,), dtype=jnp.float32)

    # Single-tile case.
    y = local_representation(x, gamma, beta, w_conv, b_conv, w_out, b_out)
    jax.block_until_ready(y)
    assert y.shape == (B, N, C) and y.dtype == x.dtype
    ref = _reference(x, gamma, beta, w_conv, b_conv, w_out, b_out)
    assert jnp.allclose(y, ref, rtol=1e-4, atol=1e-4), \
        float(jnp.max(jnp.abs(y - ref)))

    # Multi-tile case (exercises cross-tile conv halos and the larger
    # stats-pass tile).
    x2 = jax.random.normal(kx2, (B, 32, C), dtype=jnp.float32)
    y2 = local_representation(x2, gamma, beta, w_conv, b_conv, w_out, b_out,
                              max_tile_rows=8, max_stats_tile_rows=16)
    jax.block_until_ready(y2)
    ref2 = _reference(x2, gamma, beta, w_conv, b_conv, w_out, b_out)
    assert jnp.allclose(y2, ref2, rtol=1e-4, atol=1e-4), \
        float(jnp.max(jnp.abs(y2 - ref2)))

    print("KERNEL_OK")
</pallas_src>

<mosaic_0001>
module attributes {stable_mosaic.version = 11 : i64} {
  func.func @_stats_kernel(%arg0: i32, %arg1: i32, %arg2: memref<1x16x128xf32, #tpu.memory_space<vmem>>, %arg3: memref<8x128xf32, #tpu.memory_space<vmem>>, %arg4: memref<8x128xf32, #tpu.memory_space<vmem>>, %arg5: memref<2x128xf32, #tpu.memory_space<vmem>>) attributes {dimension_semantics = [#tpu.dimension_semantics<arbitrary>, #tpu.dimension_semantics<arbitrary>], iteration_bounds = array<i64: 2, 1>, scalar_prefetch = 0 : i64, scratch_operands = 1 : i64, tpu.core_type = #tpu.core_type<tc>, window_params = [{transform_indices = @transform_0, window_bounds = array<i64: 1, 16, 128>}, {pipeline_mode = #tpu.pipeline_mode<synchronous>, transform_indices = @transform_1, window_bounds = array<i64: 8, 128>}, {pipeline_mode = #tpu.pipeline_mode<synchronous>, transform_indices = @transform_2, window_bounds = array<i64: 8, 128>}]} {
    %c0_i32 = arith.constant 0 : i32
    %0 = arith.cmpi eq, %arg0, %c0_i32 : i32
    %c0_i32_0 = arith.constant 0 : i32
    %1 = arith.cmpi eq, %arg1, %c0_i32_0 : i32
    %2 = arith.andi %0, %1 : i1
    %3 = arith.extui %2 : i1 to i32
    %c0_i32_1 = arith.constant 0 : i32
    %4 = arith.cmpi ne, %3, %c0_i32_1 : i32
    scf.if %4 {
      %cst_11 = arith.constant 0.000000e+00 : f32
      %21 = vector.broadcast %cst_11 : f32 to vector<2x128xf32>
      %c0_12 = arith.constant 0 : index
      %c0_13 = arith.constant 0 : index
      %22 = vector.load %arg5[%c0_12, %c0_13] : memref<2x128xf32, #tpu.memory_space<vmem>>, vector<2x128xf32>
      tpu.vector_store %arg5[%c0_12, %c0_13], %21 {strides = array<i32>} : memref<2x128xf32, #tpu.memory_space<vmem>>, vector<2x128xf32>,
    } else {
    }
    %c0 = arith.constant 0 : index
    %c0_2 = arith.constant 0 : index
    %c0_3 = arith.constant 0 : index
    %5 = vector.load %arg2[%c0, %c0_2, %c0_3] : memref<1x16x128xf32, #tpu.memory_space<vmem>>, vector<1x16x128xf32>
    %6 = vector.shape_cast %5 : vector<1x16x128xf32> to vector<16x128xf32>
    %cst = arith.constant dense<0.000000e+00> : vector<128xf32>
    %7 = vector.multi_reduction <add>, %6, %cst [0] : vector<16x128xf32> to vector<128xf32>
    %8 = vector.shape_cast %7 : vector<128xf32> to vector<1x128xf32>
    %9 = arith.mulf %6, %6 : vector<16x128xf32>
    %cst_4 = arith.constant dense<0.000000e+00> : vector<128xf32>
    %10 = vector.multi_reduction <add>, %9, %cst_4 [0] : vector<16x128xf32> to vector<128xf32>
    %11 = vector.shape_cast %10 : vector<128xf32> to vector<1x128xf32>
    %c0_5 = arith.constant 0 : index
    %c0_6 = arith.constant 0 : index
    %12 = vector.load %arg5[%c0_5, %c0_6] : memref<2x128xf32, #tpu.memory_space<vmem>>, vector<2x128xf32>
    %13 = tpu.concatenate %8, %11 in 0 : vector<1x128xf32>, vector<1x128xf32> -> vector<2x128xf32>
    %14 = arith.addf %12, %13 : vector<2x128xf32>
    %c0_7 = arith.constant 0 : index
    %c0_8 = arith.constant 0 : index
    %15 = vector.load %arg5[%c0_7, %c0_8] : memref<2x128xf32, #tpu.memory_space<vmem>>, vector<2x128xf32>
    tpu.vector_store %arg5[%c0_7, %c0_8], %14 {strides = array<i32>} : memref<2x128xf32, #tpu.memory_space<vmem>>, vector<2x128xf32>,
    %c1_i32 = arith.constant 1 : i32
    %16 = arith.cmpi eq, %arg0, %c1_i32 : i32
    %c0_i32_9 = arith.constant 0 : i32
    %17 = arith.cmpi eq, %arg1, %c0_i32_9 : i32
    %18 = arith.andi %16, %17 : i1
    %19 = arith.extui %18 : i1 to i32
    %c0_i32_10 = arith.constant 0 : i32
    %20 = arith.cmpi ne, %19, %c0_i32_10 : i32
    scf.if %20 {
      %c0_11 = arith.constant 0 : index
      %c0_12 = arith.constant 0 : index
      %21 = vector.load %arg5[%c0_11, %c0_12] : memref<2x128xf32, #tpu.memory_space<vmem>>, vector<1x128xf32>
      %cst_13 = arith.constant 3.125000e-02 : f32
      %22 = vector.broadcast %cst_13 : f32 to vector<1x128xf32>
      %23 = arith.mulf %21, %22 : vector<1x128xf32>
      %c1 = arith.constant 1 : index
      %c0_14 = arith.constant 0 : index
      %24 = vector.load %arg5[%c1, %c0_14] : memref<2x128xf32, #tpu.memory_space<vmem>>, vector<1x128xf32>
      %cst_15 = arith.constant 3.125000e-02 : f32
      %25 = vector.broadcast %cst_15 : f32 to vector<1x128xf32>
      %26 = arith.mulf %24, %25 : vector<1x128xf32>
      %27 = arith.mulf %23, %23 : vector<1x128xf32>
      %28 = arith.subf %26, %27 : vector<1x128xf32>
      %c0_16 = arith.constant 0 : index
      %c0_17 = arith.constant 0 : index
      %29 = vector.load %arg3[%c0_16, %c0_17] : memref<8x128xf32, #tpu.memory_space<vmem>>, vector<1x128xf32>
      %c1_18 = arith.constant 1 : index
      %c0_19 = arith.constant 0 : index
      %30 = vector.load %arg3[%c1_18, %c0_19] : memref<8x128xf32, #tpu.memory_space<vmem>>, vector<1x128xf32>
      %cst_20 = arith.constant 9.99999974E-6 : f32
      %31 = vector.broadcast %cst_20 : f32 to vector<1x128xf32>
      %32 = arith.addf %28, %31 : vector<1x128xf32>
      %33 = math.rsqrt %32 : vector<1x128xf32>
      %34 = arith.mulf %29, %33 : vector<1x128xf32>
      %35 = arith.mulf %23, %34 : vector<1x128xf32>
      %36 = arith.subf %30, %35 : vector<1x128xf32>
      %cst_21 = arith.constant 0.000000e+00 : f32
      %37 = vector.broadcast %cst_21 : f32 to vector<6x128xf32>
      %38 = tpu.concatenate %34, %36, %37 in 0 : vector<1x128xf32>, vector<1x128xf32>, vector<6x128xf32> -> vector<8x128xf32>
      %c0_22 = arith.constant 0 : index
      %c0_23 = arith.constant 0 : index
      %39 = vector.load %arg4[%c0_22, %c0_23] : memref<8x128xf32, #tpu.memory_space<vmem>>, vector<8x128xf32>
      tpu.vector_store %arg4[%c0_22, %c0_23], %38 {strides = array<i32>} : memref<8x128xf32, #tpu.memory_space<vmem>>, vector<8x128xf32>,
    } else {
    }
    return
  }
  func.func @transform_0(%arg0: i32, %arg1: i32) -> (i32, i32, i32) {
    %c0_i32 = arith.constant 0 : i32
    %c0_i32_0 = arith.constant 0 : i32
    return %arg0, %arg1, %c0_i32 : i32, i32, i32
  }
  func.func @transform_1(%arg0: i32, %arg1: i32) -> (i32, i32) {
    %c0_i32 = arith.constant 0 : i32
    %c0_i32_0 = arith.constant 0 : i32
    %c0_i32_1 = arith.constant 0 : i32
    return %c0_i32, %c0_i32_0 : i32, i32
  }
  func.func @transform_2(%arg0: i32, %arg1: i32) -> (i32, i32) {
    %c0_i32 = arith.constant 0 : i32
    %c0_i32_0 = arith.constant 0 : i32
    %c0_i32_1 = arith.constant 0 : i32
    return %c0_i32, %c0_i32_0 : i32, i32
  }
}

</mosaic_0001>

<llo_original>
// kernel: tpu_custom_call.1
$region0: #{tpu_custom_call.1}
  #allocation0 [shape = 'u32[]', space=smem, size = 0x4, offset = 0x4, fixed_abs, tag = 'smem constant byte address 0x4 - core index']
  #allocation1 [shape = 'u32[144,128]{1,0:T(1,128)}', space=vmem, size = 0x12000, scoped, tag = 'internal scratch']
  #allocation2 [shape = 'f32[2,128]{1,0:T(2,128)}', space=vmem, size = 0x400, scoped, tag = 'scratch operand']
  %s0 = inlined_call_operand.hbm [shape: f32[2,16,128], index: 0, kind: input, shape index: {}]
  %s1 = inlined_call_operand.hbm [shape: f32[8,128], index: 1, kind: input, shape index: {}]
  %s2 = inlined_call_operand.hbm [shape: f32[8,128], index: 2, kind: output, shape index: {}]
  %s3 = sld [smem:[#allocation0]]
  $region57: #{tpu_custom_call.1} parent=0
    _
  %s5 = ssub.s32 1, %s3
  %s6 = scalar_select 0, %s5, %s3
  $region1: #{tpu_custom_call.1} parent=0
    #allocation3 [shape = 'u8[16384]{0}', space=vmem, size = 0x4000, scoped, tag = 'input window, operand 0']
    #allocation4 [shape = 's32[2]{0}', space=sflag, size = 0x8, scoped, tag = 'scoped memory for tpu_custom_call.1']
    #allocation5 [shape = 's32[2]{0}', space=sflag, size = 0x8, scoped, tag = 'scoped memory for tpu_custom_call.1']
    #allocation6 [shape = 'u8[4096]{0}', space=vmem, size = 0x1000, scoped, tag = 'input window, operand 1, single buffered']
    #allocation7 [shape = 's32[1]{0}', space=sflag, size = 0x4, scoped, tag = 'scoped memory for tpu_custom_call.1']
    #allocation8 [shape = 'u8[4096]{0}', space=vmem, size = 0x1000, scoped, tag = 'output window, operand 0, single buffered']
    %7 = vsyncpa [#allocation4], 0
    %s8 = scalar_lea.sflag [#allocation4], 1
    %9 = vsyncpa %s8, 0
    %10 = vsyncpa [#allocation7], 0
    %11 = vsyncpa [#allocation5], 0
    loop: start=0, step=1, limit=4
    $region2: #{tpu_custom_call.1} parent=1 // loop_pre_header
      _
    $region3: #{tpu_custom_call.1} parent=1 // loop_header
      %s13 = sphi 0, %s17
      %p14 = scmp.ge.s32.totalorder %s13, 4
      %s20 = sphi 0, %s32
      %s21 = sphi 0, %s28
      %s22 = sphi 0, %s20
      %s23 = sphi 0, %s21
      %s24 = sphi 0, %s22
      %s25 = sphi 0, %s23
      %s37 = sphi 0, %s39
      %s40 = sphi 0, %s37
      %s41 = sphi 0, %s40
      %s57 = sphi 0, %s41
      %s61 = sphi 0, %s61
      %s63 = sphi 0, %s61
      %s64 = sphi 0, %s63
      %s78 = sphi 0, %s64
      %s82 = sphi 0, %s82
      %s84 = sphi 0, %s82
      %s85 = sphi 0, %s84
      %s99 = sphi 0, %s85
    $region4: #{tpu_custom_call.1} parent=1 // loop_header_branch
      %16 = sbr.rel (%p14) target = $region8
    $region5: #{tpu_custom_call.1} parent=1 // loop_body
      %s18 = ssub.s32 %s13, 1
      %s19 = ssub.s32 %s13, 2
      %s26 = sadd.s32 1, %s21
      %p27 = scmp.ge.s32.totalorder %s26, 1
      %s28 = scalar_select %p27, 0, %s26
      %s29 = sadd.s32 1, %s20
      %s30 = scalar_select %p27, %s29, %s20
      %p31 = scmp.ge.s32.totalorder %s30, 2
      %s32 = scalar_select %p31, 0, %s30
      %s33 = ssub.s32 %s20, %s32
      %s34 = ssub.s32 %s21, %s28
      %s35 = sor.u32 %s33, %s34
      %p36 = scmp.eq.s32.totalorder %s35, 0
      %s38 = sadd.s32 %s37, 1
      %s39 = scalar_select %p36, %s37, %s38
      %p42 = pneg %p36
      %p43 = scmp.eq.s32.totalorder %s13, 1
      %p44 = por %p42, %p43
      %p45 = scmp.ne.s32.totalorder %s37, %s40
      %p46 = scmp.eq.s32.totalorder %s13, 0
      %p47 = por %p45, %p46
      %p48 = scmp.ne.s32.totalorder %s37, %s40
      %p49 = scmp.eq.s32.totalorder %s18, 1
      %p50 = por %p48, %p49
      %p51 = scmp.ne.s32.totalorder %s40, %s41
      %p52 = scmp.eq.s32.totalorder %s18, 0
      %p53 = por %p51, %p52
      %p54 = scmp.ne.s32.totalorder %s40, %s41
      %p55 = scmp.eq.s32.totalorder %s19, 1
      %p56 = por %p54, %p55
      %p58 = scmp.ne.s32.totalorder %s41, %s57
      %p59 = scmp.eq.s32.totalorder %s19, 0
      %p60 = por %p58, %p59
      %s62 = sadd.s32 %s61, 1
      %p65 = scmp.eq.s32.totalorder %s13, 1
      %p66 = scmp.ne.s32.totalorder %s61, %s63
      %p67 = scmp.eq.s32.totalorder %s13, 0
      %p68 = por %p66, %p67
      %p69 = scmp.ne.s32.totalorder %s61, %s63
      %p70 = scmp.eq.s32.totalorder %s18, 1
      %p71 = por %p69, %p70
      %p72 = scmp.ne.s32.totalorder %s63, %s64
      %p73 = scmp.eq.s32.totalorder %s18, 0
      %p74 = por %p72, %p73
      %p75 = scmp.ne.s32.totalorder %s63, %s64
      %p76 = scmp.eq.s32.totalorder %s19, 1
      %p77 = por %p75, %p76
      %p79 = scmp.ne.s32.totalorder %s64, %s78
      %p80 = scmp.eq.s32.totalorder %s19, 0
      %p81 = por %p79, %p80
      %s83 = sadd.s32 %s82, 1
      %p86 = scmp.eq.s32.totalorder %s13, 1
      %p87 = scmp.ne.s32.totalorder %s82, %s84
      %p88 = scmp.eq.s32.totalorder %s13, 0
      %p89 = por %p87, %p88
      %p90 = scmp.ne.s32.totalorder %s82, %s84
      %p91 = scmp.eq.s32.totalorder %s18, 1
      %p92 = por %p90, %p91
      %p93 = scmp.ne.s32.totalorder %s84, %s85
      %p94 = scmp.eq.s32.totalorder %s18, 0
      %p95 = por %p93, %p94
      %p96 = scmp.ne.s32.totalorder %s84, %s85
      %p97 = scmp.eq.s32.totalorder %s19, 1
      %p98 = por %p96, %p97
      %p100 = scmp.ne.s32.totalorder %s85, %s99
      %p101 = scmp.eq.s32.totalorder %s19, 0
      %p102 = por %p100, %p101
      %p103 = scmp.le.s32.totalorder 1, %s13
      %p104 = scmp.lt.s32.totalorder %s13, 3
      %p105 = pnand %p103, %p104
      %p106 = pneg %p105
      // Predicated region
      $region9: #{tpu_custom_call.1} parent=5 // pred_check
        _
      $region10: #{tpu_custom_call.1} parent=5 // pred_check_branch
        %108 = sbr.rel (%p105) target = $region12
      $region11: #{tpu_custom_call.1} parent=5 // pred_region
        %s109 = ssub.s32 %s13, 1
        // Predicated region
        $region13: #{tpu_custom_call.1} parent=11 // pred_check
          %p110 = pneg %p74
        $region14: #{tpu_custom_call.1} parent=11 // pred_check_branch
          %112 = sbr.rel (%p110) target = $region16
        $region15: #{tpu_custom_call.1} parent=11 // pred_region
          %s114 = ssub.s32 128, 128
          %115 = vsyncadd [#allocation7], %s114
          %s117 = sshll.u32 [#allocation6], 4
          %s118 = int_to_ptr.vmem [resolvable:$true] %s117
          %120 = dma.hbm_to_vmem [thread:$0]  %s1, 128, %s118, [#allocation7]
        $region16: #{tpu_custom_call.1} parent=11 // pred_fallthru
          _
      $region12: #{tpu_custom_call.1} parent=5 // pred_fallthru
        _
      %p121 = scmp.lt.s32.totalorder %s13, 2
      // Predicated region
      $region17: #{tpu_custom_call.1} parent=5 // pred_check
        %p122 = pneg %p121
      $region18: #{tpu_custom_call.1} parent=5 // pred_check_branch
        %124 = sbr.rel (%p122) target = $region20
      $region19: #{tpu_custom_call.1} parent=5 // pred_region
        // Predicated region
        $region21: #{tpu_custom_call.1} parent=19 // pred_check
          %p125 = pneg %p47
        $region22: #{tpu_custom_call.1} parent=19 // pred_check_branch
          %127 = sbr.rel (%p125) target = $region24
        $region23: #{tpu_custom_call.1} parent=19 // pred_region
          %s128 = sand.u32 %s37, 1
          %s129 = scalar_lea.sflag [#allocation4], %s128
          %s130 = sand.u32 %s37, 1
          %s131 = smul.addr %s130, 16
          %s132 = scalar_lea.vmem [#allocation3], %s131
          %s133 = smul.u32 2, %s21
          %s135 = ssub.s32 256, 256
          %136 = vsyncadd %s129, %s135
          %s137 = smul.addr %s20, 2
          %s138 = sadd.s32 %s133, %s137
          %s139 = smul.addr %s138, 128
          %s140 = scalar_lea.hbm %s0, %s139
          %s141 = sshll.u32 %s132, 4
          %s142 = int_to_ptr.vmem [resolvable:$true] %s141
          %147 = dma.hbm_to_vmem [thread:$0]  %s140, 256, %s142, %s129, 128, 128, 8
        $region24: #{tpu_custom_call.1} parent=19 // pred_fallthru
          _
      $region20: #{tpu_custom_call.1} parent=5 // pred_fallthru
        _
      %p148 = scmp.le.s32.totalorder 1, %s13
      %p149 = scmp.lt.s32.totalorder %s13, 3
      %p150 = pnand %p148, %p149
      %p151 = pneg %p150
      // Predicated region
      $region25: #{tpu_custom_call.1} parent=5 // pred_check
        _
      $region26: #{tpu_custom_call.1} parent=5 // pred_check_branch
        %153 = sbr.rel (%p150) target = $region28
      $region27: #{tpu_custom_call.1} parent=5 // pred_region
        %s154 = ssub.s32 %s13, 1
        %s155 = sand.u32 %s40, 1
        %s156 = scalar_lea.sflag [#allocation4], %s155
        %s157 = sand.u32 %s40, 1
        %s158 = smul.addr %s157, 16
        %s159 = scalar_lea.vmem [#allocation3], %s158
        // Predicated region
        $region29: #{tpu_custom_call.1} parent=27 // pred_check
          %p160 = pneg %p53
        $region30: #{tpu_custom_call.1} parent=27 // pred_check_branch
          %162 = sbr.rel (%p160) target = $region32
        $region31: #{tpu_custom_call.1} parent=27 // pred_region
          %163 = dma.done %s156, 256
        $region32: #{tpu_custom_call.1} parent=27 // pred_fallthru
          _
        // Predicated region
        $region33: #{tpu_custom_call.1} parent=27 // pred_check
          %p164 = pneg %p74
        $region34: #{tpu_custom_call.1} parent=27 // pred_check_branch
          %166 = sbr.rel (%p164) target = $region36
        $region35: #{tpu_custom_call.1} parent=27 // pred_region
          %167 = dma.done [#allocation7], 128
        $region36: #{tpu_custom_call.1} parent=27 // pred_fallthru
          _
        %s168 = sand.u32 %s40, 1
        %s169 = scalar_lea.sflag [#allocation4], %s168
        %s170 = sand.u32 %s40, 1
        %s171 = smul.addr %s170, 16
        %s172 = scalar_lea.vmem [#allocation3], %s171
        %p173 = pneg %p53
        %p174 = pneg %p50
        %p175 = pneg %p74
        %p176 = pneg %p71
        %p177 = pneg %p95
        %p178 = pneg %p92
        %s179 = smul.u32 2, %s23
        %p180 = scmp.eq.s32.totalorder %s22, 0
        %p181 = scmp.eq.s32.totalorder %s23, 0
        %p182 = pnand %p180, %p181
        %p183 = pneg %p182
        // Predicated region
        $region37: #{tpu_custom_call.1} parent=27 // pred_check
          _
        $region38: #{tpu_custom_call.1} parent=27 // pred_check_branch
          %185 = sbr.rel (%p182) target = $region40
        $region39: #{tpu_custom_call.1} parent=27 // pred_region
          %186 = vst [vmem:[#allocation2] sm:$0x3] 0.0
        $region40: #{tpu_custom_call.1} parent=27 // pred_fallthru
          _
        %v187 = vld [vmem:[%s159] sm:$0xff]
        %v188 = vld [vmem:[%s159 + $0x8] sm:$0xff]
        %v189 = vadd.f32 %v187, %v188
        %v190 = vrot.slane %v189, 4
        %v191 = vadd.f32 %v189, %v190
        %v192 = vrot.slane %v191, 2
        %v193 = vadd.f32 %v191, %v192
        %v194 = vrot.slane %v193, 1
        %v195 = vadd.f32 %v193, %v194
        %v196 = vmul.f32 %v187, %v187
        %v197 = vmul.f32 %v188, %v188
        %v198 = vadd.f32 %v196, %v197
        %v199 = vrot.slane %v198, 4
        %v200 = vadd.f32 %v198, %v199
        %v201 = vrot.slane %v200, 2
        %v202 = vadd.f32 %v200, %v201
        %v203 = vrot.slane %v202, 1
        %v204 = vadd.f32 %v202, %v203
        %v205 = vld [vmem:[#allocation2] sm:$0x3]
        %vm206 = vcmask 1040384
        %v207 = vsel %vm206, %v195, %v204
        %v208 = vadd.f32 %v205, %v207
        %209 = vst [vmem:[#allocation2] sm:$0x3] %v208
        %p210 = scmp.eq.s32.totalorder %s22, 1
        %p211 = pnand %p210, %p181
        %p212 = pneg %p211
        // Predicated region
        $region41: #{tpu_custom_call.1} parent=27 // pred_check
          _
        $region42: #{tpu_custom_call.1} parent=27 // pred_check_branch
          %214 = sbr.rel (%p211) target = $region44
        $region43: #{tpu_custom_call.1} parent=27 // pred_region
          %v215 = vld [vmem:[#allocation2] sm:$0x1]
          %v216 = vmul.f32 %v215, 0.03125
          %v217 = vld [vmem:[#allocation2 + $0x1] sm:$0x1]
          %v218 = vmul.f32 %v217, 0.03125
          %v219 = vmul.f32 %v216, %v216
          %v220 = vsub.f32 %v218, %v219
          %v221 = vld [vmem:[#allocation6] sm:$0x1]
          %v222 = vld [vmem:[#allocation6 + $0x1] sm:$0x1]
          %v223 = vadd.f32 %v220, 1e-05
          %v224 = vrsqrt.pop %v223
          %v225 = vmul.f32 %v221, %v224
          %v226 = vmul.f32 %v216, %v225
          %v227 = vsub.f32 %v222, %v226
          %v229 = vrot.slane %v227, 7
          %v231 = vsel %vm206, %v225, %v229
          %vm232 = vcmask 1041408
          %v233 = vsel %vm232, %v231, 0.0
          %234 = vst [vmem:[#allocation8] sm:$0xff] %v233
        $region44: #{tpu_custom_call.1} parent=27 // pred_fallthru
          _
        // Predicated region
        $region45: #{tpu_custom_call.1} parent=27 // pred_check
          %p235 = pneg %p92
        $region46: #{tpu_custom_call.1} parent=27 // pred_check_branch
          %237 = sbr.rel (%p235) target = $region48
        $region47: #{tpu_custom_call.1} parent=27 // pred_region
          %s239 = ssub.s32 128, 128
          %240 = vsyncadd [#allocation5], %s239
          %s242 = sshll.u32 [#allocation8], 4
          %s243 = int_to_ptr.vmem [resolvable:$true] %s242
          %245 = dma.vmem_to_hbm [thread:$0]  %s243, 128, %s2, [#allocation5]
        $region48: #{tpu_custom_call.1} parent=27 // pred_fallthru
          _
        // Predicated region
        $region49: #{tpu_custom_call.1} parent=27 // pred_check
          %p246 = pneg %p92
        $region50: #{tpu_custom_call.1} parent=27 // pred_check_branch
          %248 = sbr.rel (%p246) target = $region52
        $region51: #{tpu_custom_call.1} parent=27 // pred_region
          %249 = dma.done [#allocation5], 128
        $region52: #{tpu_custom_call.1} parent=27 // pred_fallthru
          _
      $region28: #{tpu_custom_call.1} parent=5 // pred_fallthru
        _
      %p250 = scmp.le.s32.totalorder 2, %s13
      // Predicated region
      $region53: #{tpu_custom_call.1} parent=5 // pred_check
        %p251 = pneg %p250
      $region54: #{tpu_custom_call.1} parent=5 // pred_check_branch
        %253 = sbr.rel (%p251) target = $region56
      $region55: #{tpu_custom_call.1} parent=5 // pred_region
        %s254 = ssub.s32 %s13, 2
      $region56: #{tpu_custom_call.1} parent=5 // pred_fallthru
        _
    $region6: #{tpu_custom_call.1} parent=1 // loop_footer
      %s17 = sadd.s32 1, %s13
    $region7: #{tpu_custom_call.1} parent=1 // loop_footer_branch
      %12 = sbr.rel target = $region3
    $region8: #{tpu_custom_call.1} parent=1 // loop_exit
      _
    %255 = vsyncpa [#allocation4], 1
    %s256 = scalar_lea.sflag [#allocation4], 1
    %257 = vsyncpa %s256, 1
    %258 = vsyncpa [#allocation7], 1
    %259 = vsyncpa [#allocation5], 1
    %s260 = scalar_lea.sflag [#allocation5], 1
    %261 = vsyncpa %s260, 1

</llo_original>
